<compile_context>
chip_gen: v7x
topology: tpu7x:2x2x1
jax: 0.10.0
libtpu: 0.0.40
codegen_flags: <defaults>
</compile_context>

<pallas_src>
import jax
import jax.numpy as jnp
from jax import lax
from jax.experimental import pallas as pl
from jax.experimental.pallas import tpu as pltpu


# ---------------------------------------------------------------------------
# Kernels
# ---------------------------------------------------------------------------
def socialmf_fused_kernel(nbr_ref, hu_ref, hi2_ref, uw_ref, logits_ref, nbr_out_ref):
    """Small user table resident in VMEM: nbr_emb = (one-hot counts @ uw) * inv_len."""
    # Logits: one multiply + lane reduce writing the whole (2, tb) block at once.
    hu = hu_ref[...]                                          # (tb, D) f32
    logits_ref[...] = jnp.sum(hu[None, :, :] * hi2_ref[...], axis=-1)

    nbr = nbr_ref[...]                                        # (tb, N) int32
    valid_f = (nbr != 0).astype(jnp.float32)
    inv_len = pl.reciprocal(
        jnp.maximum(jnp.sum(valid_f, axis=1, keepdims=True), 1.0), approx=True)

    tb, n_nbr = nbr.shape
    n_users, d = uw_ref.shape

    # Adjacency counts are built in 128-lane strips over the user axis; each strip's
    # N-compare add chain stays vreg resident and is fed straight to the MXU, so the
    # full (tb, U) plane is never stored/reloaded.  Duplicate neighbor ids count
    # multiple times (matching the reference gather-and-sum), and user row 0 was
    # zeroed in the wrapper so the id-0 padding column needs no extra mask pass.
    acc = jnp.zeros((tb, d), jnp.float32)
    for u0 in range(0, n_users, 128):
        w = min(128, n_users - u0)
        ids = u0 + lax.broadcasted_iota(jnp.int32, (1, w), 1)
        cnt = (nbr[:, 0:1] == ids).astype(jnp.float32)
        for n in range(1, n_nbr):
            cnt = cnt + (nbr[:, n:n + 1] == ids).astype(jnp.float32)
        # bf16 MXU inputs (counts are small exact integers); f32 accumulation.
        acc = acc + jnp.dot(cnt.astype(jnp.bfloat16), uw_ref[u0:u0 + w, :],
                            preferred_element_type=jnp.float32)

    # inv_len is applied to the (tb, D) result instead of the (tb, U) adjacency.
    nbr_out_ref[...] = acc * inv_len


def socialmf_gathered_kernel(nbr_smem, nbr_ref, hu_ref, hi2_ref, uw_hbm,
                             logits_ref, nbr_out_ref, buf, sem):
    """Large user table: in-kernel double-buffered row-DMA gather from HBM."""
    tb, n_nbr = nbr_ref.shape
    base = pl.program_id(0) * tb

    hu = hu_ref[...]                                          # (tb, D) f32
    logits_ref[...] = jnp.sum(hu[None, :, :] * hi2_ref[...], axis=-1)

    def start_row(b, slot):
        off = (base + b) * n_nbr
        for n in range(n_nbr):                                # N is small & static
            idx = nbr_smem[off + n]                           # scalar neighbor id (SMEM)
            pltpu.make_async_copy(uw_hbm.at[idx], buf.at[slot, n],
                                  sem.at[slot, n]).start()

    def wait_row(slot):
        for n in range(n_nbr):
            pltpu.make_async_copy(uw_hbm.at[0], buf.at[slot, n],
                                  sem.at[slot, n]).wait()

    start_row(0, 0)

    def body(b, carry):
        slot = lax.rem(b, 2)
        wait_row(slot)

        @pl.when(b + 1 < tb)
        def _():
            start_row(b + 1, 1 - slot)

        # Row 0 of the gather source was zeroed in the wrapper, so padded neighbor
        # slots (id 0) contribute nothing to the sum.
        nbr_out_ref[b, :] = jnp.sum(buf[slot], axis=0)
        return carry

    lax.fori_loop(0, tb, body, 0)

    # Normalize by the clamped valid-neighbor count, vectorized over the whole tile
    # (exact divide here; it is a single (tb, D) pass and keeps this path bit-close).
    valid_f = (nbr_ref[...] != 0).astype(jnp.float32)
    nbr_len = jnp.maximum(jnp.sum(valid_f, axis=1, keepdims=True), 1.0)
    nbr_out_ref[...] = nbr_out_ref[...] / nbr_len


# ---------------------------------------------------------------------------
# Sizing helpers (per-generation VMEM budgeting, honest padding accounting)
# ---------------------------------------------------------------------------
def _round_up(x, m):
    return ((x + m - 1) // m) * m


def _vmem_capacity_bytes():
    try:
        cap = int(pltpu.get_tpu_info().vmem_capacity_bytes)
        return max(32 << 20, min(cap, 128 << 20))
    except Exception:                    # API mismatch / interpret mode: be conservative
        return 64 << 20                  # v7x-sized fallback


def _tile_vmem_bytes(tb, n_nbr, d, fused, table_bytes):
    """Per-tile VMEM estimate incl. lane/sublane padding and double buffering."""
    np_ = _round_up(n_nbr, 128)          # nbr last dim padded to 128 lanes
    dp = _round_up(d, 128)               # embedding dim padded to 128 lanes
    dbuf = 2                             # Pallas double-buffers every pipelined block
    b = tb * np_ * 4 * dbuf              # nbr
    b += tb * dp * 4 * dbuf              # hu
    b += 2 * tb * dp * 4 * dbuf          # stacked pos/neg items
    b += 8 * tb * 4 * dbuf               # (2, tb) logits, sublane-padded to 8
    b += tb * dp * 4 * dbuf              # nbr_emb output
    if fused:
        b += table_bytes * dbuf          # resident bf16 user table (double-buffered)
        b += tb * 128 * 4 * 6            # per-strip compare/accumulate temporaries
        b += tb * dp * 4 * 2             # f32 matmul accumulator + scaled result
    else:
        b += 2 * n_nbr * dp * 4          # (2, N, D) gather double buffer
        b += tb * np_ * 4                # mask temporaries
    return b


def _pick_tb(batch, n_nbr, d, fused, table_bytes, budget):
    """Largest 128-aligned tile that fits the budget; prefer an even tile count so the
    'parallel' grid axis load-balances across v7x's two TensorCores (harmless on the
    single-core v5e/v6e: per-step overhead is ~0.35 us)."""
    cands = [t for t in (2048, 1024, 512, 256, 128) if batch % t == 0]
    if not cands:
        return batch                     # small / unaligned batch: one tile over the batch
    feas = [t for t in cands
            if _tile_vmem_bytes(t, n_nbr, d, fused, table_bytes) <= budget]
    if not feas:
        return cands[-1]
    t = feas[0]
    if (batch // t) % 2 == 1 and batch // t > 1:
        for t2 in feas[1:]:
            if (batch // t2) % 2 == 0:
                return t2
    return t


def _fused_is_profitable(n_users, n_nbr, d, table_bytes, budget):
    """Cost-model gate: fuse only when the per-row adjacency build + MXU matmul beats
    the per-row HBM gather traffic, and the bf16 table comfortably fits in VMEM."""
    if 2 * table_bytes > budget // 2:    # leave at least half the budget for the tiles
        return False
    if n_users > 8192:                   # keep the unrolled strip loop traceable
        return False
    valu_elems = n_users * (n_nbr + 2)   # compares + adds + bf16 cast per strip row
    mxu_macs = n_users * d
    fused_ns = valu_elems / 3500.0 + mxu_macs / 2.0e5      # ~VPU / ~MXU elems per ns
    gather_ns = n_nbr * (60.0 + d * 4.0)                   # per small row-DMA cost
    return fused_ns <= gather_ns


# ---------------------------------------------------------------------------
# Forward wrapper
# ---------------------------------------------------------------------------
def socialmf_forward(user_weight, item_weight, uid, nbr, pos, neg, *,
                     tb=None, force_fused=None):
    """Returns (pos_logits, neg_logits, user_emb, nbr_emb, pos_hi, neg_hi)."""
    B, N = nbr.shape
    U, D = user_weight.shape

    # Glue: tiny nn.Embedding lookups stay as wrapper-side XLA gathers.
    user_emb = user_weight[uid]                               # (B, D)
    pos_hi = item_weight[pos]                                 # (B, D)
    neg_hi = item_weight[neg]                                 # (B, D)
    hi2 = jnp.stack([pos_hi, neg_hi], axis=0)                 # (2, B, D): one DMA stream

    cap = _vmem_capacity_bytes()
    budget = int(cap * 0.55)                                  # per-generation tile budget
    vmem_limit = int(cap * 0.75)

    table_bytes = _round_up(U, 16) * _round_up(D, 128) * 2    # padded bf16 resident table
    if force_fused is None:
        fused = _fused_is_profitable(U, N, D, table_bytes, budget)
    else:
        fused = bool(force_fused)

    if tb is None:
        tb = _pick_tb(B, N, D, fused, table_bytes, budget)
    assert B % tb == 0, "batch must be divisible by the tile size"
    n_tiles = B // tb

    out_shape = (
        jax.ShapeDtypeStruct((2, B), jnp.float32),            # lane-dense logits slab
        jax.ShapeDtypeStruct((B, D), jnp.float32),            # nbr_emb
    )
    compiler_params = pltpu.CompilerParams(
        dimension_semantics=("parallel",), vmem_limit_bytes=vmem_limit)

    if fused:
        # Row 0 zeroed (padding id) so the kernel needs no id-0 mask pass.
        uw0_bf16 = user_weight.astype(jnp.bfloat16).at[0].set(0.0)
        logits, nbr_emb = pl.pallas_call(
            socialmf_fused_kernel,
            out_shape=out_shape,
            grid=(n_tiles,),
            in_specs=[
                pl.BlockSpec((tb, N), lambda i: (i, 0)),          # nbr
                pl.BlockSpec((tb, D), lambda i: (i, 0)),          # hu
                pl.BlockSpec((2, tb, D), lambda i: (0, i, 0)),    # stacked pos/neg items
                # Resident user table; constant index_map reuses the same block every
                # grid step (its double-buffer footprint is counted in the budget).
                pl.BlockSpec((U, D), lambda i: (0, 0)),
            ],
            out_specs=(pl.BlockSpec((2, tb), lambda i: (0, i)),
                       pl.BlockSpec((tb, D), lambda i: (i, 0))),
            compiler_params=compiler_params,
        )(nbr, user_emb, hi2, uw0_bf16)
    else:
        # In-kernel gather: nbr ids prefetched to SMEM, user table left in HBM and
        # row-DMA'd into a double-buffered VMEM scratch -- the (B, N, D) gather is
        # never materialized in HBM.
        uw0 = user_weight.at[0].set(0.0)                      # zeroed padding row, f32
        nbr_flat = nbr.reshape(-1).astype(jnp.int32)          # 1-D minimizes SMEM padding
        grid_spec = pltpu.PrefetchScalarGridSpec(
            num_scalar_prefetch=1,
            grid=(n_tiles,),
            in_specs=[
                pl.BlockSpec((tb, N), lambda i, s: (i, 0)),
                pl.BlockSpec((tb, D), lambda i, s: (i, 0)),
                pl.BlockSpec((2, tb, D), lambda i, s: (0, i, 0)),
                pl.BlockSpec(memory_space=pl.ANY),            # user table stays in HBM
            ],
            out_specs=(pl.BlockSpec((2, tb), lambda i, s: (0, i)),
                       pl.BlockSpec((tb, D), lambda i, s: (i, 0))),
            scratch_shapes=[
                pltpu.VMEM((2, N, D), jnp.float32),           # per-row neighbor buffers
                pltpu.SemaphoreType.DMA((2, N)),
            ],
        )
        logits, nbr_emb = pl.pallas_call(
            socialmf_gathered_kernel,
            out_shape=out_shape,
            grid_spec=grid_spec,
            compiler_params=compiler_params,
        )(nbr_flat, nbr, user_emb, hi2, uw0)

    return logits[0], logits[1], user_emb, nbr_emb, pos_hi, neg_hi


# ---------------------------------------------------------------------------
# Pure-JAX reference + demo
# ---------------------------------------------------------------------------
def _reference_forward(user_weight, item_weight, uid, nbr, pos, neg):
    user_emb = user_weight[uid]
    pos_hi = item_weight[pos]
    neg_hi = item_weight[neg]
    pos_logits = jnp.sum(user_emb * pos_hi, axis=-1)
    neg_logits = jnp.sum(user_emb * neg_hi, axis=-1)
    mask = (nbr == 0)
    nbr_len = jnp.maximum(nbr.shape[1] - jnp.sum(mask, axis=1, keepdims=True), 1)
    ne = user_weight[nbr] * (~mask)[..., None].astype(jnp.float32)
    nbr_emb = jnp.sum(ne, axis=1) / nbr_len.astype(jnp.float32)
    return (pos_logits, neg_logits, user_emb, nbr_emb, pos_hi, neg_hi)


# TODO(synk): eval_all_users is a separate evaluation path (not part of forward) and is
# not implemented here; `seq` from the batch tuple is unused by forward.

if __name__ == "__main__":
    user_num, item_num, edim = 50, 60, 32
    B, N = 8, 8

    key = jax.random.PRNGKey(0)
    k_u, k_i, k_uid, k_nbr, k_pos, k_neg = jax.random.split(key, 6)

    # Deterministic parameter init matching nn.init.uniform_ ranges.
    user_weight = jax.random.uniform(
        k_u, (user_num, edim), jnp.float32,
        minval=-0.5 / user_num, maxval=0.5 / user_num)
    item_weight = jax.random.uniform(
        k_i, (item_num, edim), jnp.float32,
        minval=-0.5 / item_num, maxval=0.5 / item_num)

    uid = jax.random.randint(k_uid, (B,), 1, user_num, dtype=jnp.int32)
    nbr = jax.random.randint(k_nbr, (B, N), 0, user_num, dtype=jnp.int32)  # 0 = padding
    pos = jax.random.randint(k_pos, (B,), 1, item_num, dtype=jnp.int32)
    neg = jax.random.randint(k_neg, (B,), 1, item_num, dtype=jnp.int32)

    refs = _reference_forward(user_weight, item_weight, uid, nbr, pos, neg)

    # Fused path (adjacency strips -> MXU) -- the cost model picks it for this shape.
    outs_fused = jax.block_until_ready(
        socialmf_forward(user_weight, item_weight, uid, nbr, pos, neg))
    # In-kernel DMA-gather path (forced) -- covers the large-user-table code path.
    outs_gather = jax.block_until_ready(
        socialmf_forward(user_weight, item_weight, uid, nbr, pos, neg,
                         force_fused=False))

    # Tolerances cover pl.reciprocal(approx=True) + bf16 MXU inputs on the fused path.
    for got in (outs_fused, outs_gather):
        for o, r in zip(got, refs):
            assert o.shape == r.shape and o.dtype == r.dtype
            assert jnp.allclose(o, r, atol=1e-4, rtol=2e-2)

    print("KERNEL_OK")
</pallas_src>

<mosaic_0001>
module attributes {stable_mosaic.version = 11 : i64} {
  func.func @socialmf_fused_kernel(%arg0: i32, %arg1: memref<8x8xi32, #tpu.memory_space<vmem>>, %arg2: memref<8x32xf32, #tpu.memory_space<vmem>>, %arg3: memref<2x8x32xf32, #tpu.memory_space<vmem>>, %arg4: memref<50x32xbf16, #tpu.memory_space<vmem>>, %arg5: memref<2x8xf32, #tpu.memory_space<vmem>>, %arg6: memref<8x32xf32, #tpu.memory_space<vmem>>) attributes {dimension_semantics = [#tpu.dimension_semantics<parallel>], iteration_bounds = array<i64: 1>, scalar_prefetch = 0 : i64, scratch_operands = 0 : i64, tpu.core_type = #tpu.core_type<tc>, window_params = [{transform_indices = @transform_0, window_bounds = array<i64: 8, 8>}, {transform_indices = @transform_1, window_bounds = array<i64: 8, 32>}, {transform_indices = @transform_2, window_bounds = array<i64: 2, 8, 32>}, {pipeline_mode = #tpu.pipeline_mode<synchronous>, transform_indices = @transform_3, window_bounds = array<i64: 50, 32>}, {transform_indices = @transform_4, window_bounds = array<i64: 2, 8>}, {transform_indices = @transform_5, window_bounds = array<i64: 8, 32>}]} {
    %c0 = arith.constant 0 : index
    %c0_0 = arith.constant 0 : index
    %0 = vector.load %arg2[%c0, %c0_0] : memref<8x32xf32, #tpu.memory_space<vmem>>, vector<8x32xf32>
    %1 = vector.shape_cast %0 : vector<8x32xf32> to vector<1x8x32xf32>
    %c0_1 = arith.constant 0 : index
    %c0_2 = arith.constant 0 : index
    %c0_3 = arith.constant 0 : index
    %2 = vector.load %arg3[%c0_1, %c0_2, %c0_3] : memref<2x8x32xf32, #tpu.memory_space<vmem>>, vector<2x8x32xf32>
    %3 = vector.broadcast %1 : vector<1x8x32xf32> to vector<2x8x32xf32>
    %4 = arith.mulf %3, %2 : vector<2x8x32xf32>
    %cst = arith.constant dense<0.000000e+00> : vector<2x8xf32>
    %5 = vector.multi_reduction <add>, %4, %cst [2] : vector<2x8x32xf32> to vector<2x8xf32>
    %c0_4 = arith.constant 0 : index
    %c0_5 = arith.constant 0 : index
    %6 = vector.load %arg5[%c0_4, %c0_5] : memref<2x8xf32, #tpu.memory_space<vmem>>, vector<2x8xf32>
    tpu.vector_store %arg5[%c0_4, %c0_5], %5 {strides = array<i32>} : memref<2x8xf32, #tpu.memory_space<vmem>>, vector<2x8xf32>,
    %c0_6 = arith.constant 0 : index
    %c0_7 = arith.constant 0 : index
    %7 = vector.load %arg1[%c0_6, %c0_7] : memref<8x8xi32, #tpu.memory_space<vmem>>, vector<8x8xi32>
    %c0_i32 = arith.constant 0 : i32
    %8 = vector.broadcast %c0_i32 : i32 to vector<8x8xi32>
    %9 = arith.cmpi ne, %7, %8 : vector<8x8xi32>
    %10 = arith.extui %9 : vector<8x8xi1> to vector<8x8xi32>
    %11 = arith.sitofp %10 : vector<8x8xi32> to vector<8x8xf32>
    %cst_8 = arith.constant dense<0.000000e+00> : vector<8xf32>
    %12 = vector.multi_reduction <add>, %11, %cst_8 [1] : vector<8x8xf32> to vector<8xf32>
    %13 = vector.shape_cast %12 : vector<8xf32> to vector<8x1xf32>
    %cst_9 = arith.constant 1.000000e+00 : f32
    %14 = vector.broadcast %cst_9 : f32 to vector<8x1xf32>
    %15 = arith.maximumf %13, %14 : vector<8x1xf32>
    %16 = tpu.reciprocal %15 {approx = true} : vector<8x1xf32> -> vector<8x1xf32>
    %cst_10 = arith.constant 0.000000e+00 : f32
    %17 = vector.broadcast %cst_10 : f32 to vector<8x32xf32>
    %18 = tpu.iota {dimensions = array<i32: 1>} : vector<1x50xi32>
    %c0_i32_11 = arith.constant 0 : i32
    %19 = vector.broadcast %c0_i32_11 : i32 to vector<1x50xi32>
    %20 = arith.addi %19, %18 : vector<1x50xi32>
    %21 = vector.extract_strided_slice %7 {offsets = [0, 0], sizes = [8, 1], strides = [1, 1]} : vector<8x8xi32> to vector<8x1xi32>
    %22 = vector.broadcast %21 : vector<8x1xi32> to vector<8x50xi32>
    %23 = vector.broadcast %20 : vector<1x50xi32> to vector<8x50xi32>
    %24 = arith.cmpi eq, %22, %23 : vector<8x50xi32>
    %25 = arith.extui %24 : vector<8x50xi1> to vector<8x50xi32>
    %26 = arith.sitofp %25 : vector<8x50xi32> to vector<8x50xf32>
    %27 = vector.extract_strided_slice %7 {offsets = [0, 1], sizes = [8, 1], strides = [1, 1]} : vector<8x8xi32> to vector<8x1xi32>
    %28 = vector.broadcast %27 : vector<8x1xi32> to vector<8x50xi32>
    %29 = vector.broadcast %20 : vector<1x50xi32> to vector<8x50xi32>
    %30 = arith.cmpi eq, %28, %29 : vector<8x50xi32>
    %31 = arith.extui %30 : vector<8x50xi1> to vector<8x50xi32>
    %32 = arith.sitofp %31 : vector<8x50xi32> to vector<8x50xf32>
    %33 = arith.addf %26, %32 : vector<8x50xf32>
    %34 = vector.extract_strided_slice %7 {offsets = [0, 2], sizes = [8, 1], strides = [1, 1]} : vector<8x8xi32> to vector<8x1xi32>
    %35 = vector.broadcast %34 : vector<8x1xi32> to vector<8x50xi32>
    %36 = vector.broadcast %20 : vector<1x50xi32> to vector<8x50xi32>
    %37 = arith.cmpi eq, %35, %36 : vector<8x50xi32>
    %38 = arith.extui %37 : vector<8x50xi1> to vector<8x50xi32>
    %39 = arith.sitofp %38 : vector<8x50xi32> to vector<8x50xf32>
    %40 = arith.addf %33, %39 : vector<8x50xf32>
    %41 = vector.extract_strided_slice %7 {offsets = [0, 3], sizes = [8, 1], strides = [1, 1]} : vector<8x8xi32> to vector<8x1xi32>
    %42 = vector.broadcast %41 : vector<8x1xi32> to vector<8x50xi32>
    %43 = vector.broadcast %20 : vector<1x50xi32> to vector<8x50xi32>
    %44 = arith.cmpi eq, %42, %43 : vector<8x50xi32>
    %45 = arith.extui %44 : vector<8x50xi1> to vector<8x50xi32>
    %46 = arith.sitofp %45 : vector<8x50xi32> to vector<8x50xf32>
    %47 = arith.addf %40, %46 : vector<8x50xf32>
    %48 = vector.extract_strided_slice %7 {offsets = [0, 4], sizes = [8, 1], strides = [1, 1]} : vector<8x8xi32> to vector<8x1xi32>
    %49 = vector.broadcast %48 : vector<8x1xi32> to vector<8x50xi32>
    %50 = vector.broadcast %20 : vector<1x50xi32> to vector<8x50xi32>
    %51 = arith.cmpi eq, %49, %50 : vector<8x50xi32>
    %52 = arith.extui %51 : vector<8x50xi1> to vector<8x50xi32>
    %53 = arith.sitofp %52 : vector<8x50xi32> to vector<8x50xf32>
    %54 = arith.addf %47, %53 : vector<8x50xf32>
    %55 = vector.extract_strided_slice %7 {offsets = [0, 5], sizes = [8, 1], strides = [1, 1]} : vector<8x8xi32> to vector<8x1xi32>
    %56 = vector.broadcast %55 : vector<8x1xi32> to vector<8x50xi32>
    %57 = vector.broadcast %20 : vector<1x50xi32> to vector<8x50xi32>
    %58 = arith.cmpi eq, %56, %57 : vector<8x50xi32>
    %59 = arith.extui %58 : vector<8x50xi1> to vector<8x50xi32>
    %60 = arith.sitofp %59 : vector<8x50xi32> to vector<8x50xf32>
    %61 = arith.addf %54, %60 : vector<8x50xf32>
    %62 = vector.extract_strided_slice %7 {offsets = [0, 6], sizes = [8, 1], strides = [1, 1]} : vector<8x8xi32> to vector<8x1xi32>
    %63 = vector.broadcast %62 : vector<8x1xi32> to vector<8x50xi32>
    %64 = vector.broadcast %20 : vector<1x50xi32> to vector<8x50xi32>
    %65 = arith.cmpi eq, %63, %64 : vector<8x50xi32>
    %66 = arith.extui %65 : vector<8x50xi1> to vector<8x50xi32>
    %67 = arith.sitofp %66 : vector<8x50xi32> to vector<8x50xf32>
    %68 = arith.addf %61, %67 : vector<8x50xf32>
    %69 = vector.extract_strided_slice %7 {offsets = [0, 7], sizes = [8, 1], strides = [1, 1]} : vector<8x8xi32> to vector<8x1xi32>
    %70 = vector.broadcast %69 : vector<8x1xi32> to vector<8x50xi32>
    %71 = vector.broadcast %20 : vector<1x50xi32> to vector<8x50xi32>
    %72 = arith.cmpi eq, %70, %71 : vector<8x50xi32>
    %73 = arith.extui %72 : vector<8x50xi1> to vector<8x50xi32>
    %74 = arith.sitofp %73 : vector<8x50xi32> to vector<8x50xf32>
    %75 = arith.addf %68, %74 : vector<8x50xf32>
    %76 = arith.truncf %75 : vector<8x50xf32> to vector<8x50xbf16>
    %c0_12 = arith.constant 0 : index
    %c0_13 = arith.constant 0 : index
    %77 = vector.load %arg4[%c0_12, %c0_13] : memref<50x32xbf16, #tpu.memory_space<vmem>>, vector<50x32xbf16>
    %cst_14 = arith.constant dense<0.000000e+00> : vector<8x32xf32>
    %78 = tpu.matmul %76, %77, %cst_14 {dimension_numbers = #tpu.dot_dimension_numbers<[1], [0], [0], [1], [0, 0, 1, 1], [], []>} : vector<8x50xbf16>, vector<50x32xbf16>, vector<8x32xf32> -> vector<8x32xf32>
    %79 = arith.addf %17, %78 : vector<8x32xf32>
    %80 = vector.broadcast %16 : vector<8x1xf32> to vector<8x32xf32>
    %81 = arith.mulf %79, %80 : vector<8x32xf32>
    %c0_15 = arith.constant 0 : index
    %c0_16 = arith.constant 0 : index
    %82 = vector.load %arg6[%c0_15, %c0_16] : memref<8x32xf32, #tpu.memory_space<vmem>>, vector<8x32xf32>
    tpu.vector_store %arg6[%c0_15, %c0_16], %81 {strides = array<i32>} : memref<8x32xf32, #tpu.memory_space<vmem>>, vector<8x32xf32>,
    return
  }
  func.func @transform_0(%arg0: i32) -> (i32, i32) {
    %c0_i32 = arith.constant 0 : i32
    %c0_i32_0 = arith.constant 0 : i32
    return %arg0, %c0_i32 : i32, i32
  }
  func.func @transform_1(%arg0: i32) -> (i32, i32) {
    %c0_i32 = arith.constant 0 : i32
    %c0_i32_0 = arith.constant 0 : i32
    return %arg0, %c0_i32 : i32, i32
  }
  func.func @transform_2(%arg0: i32) -> (i32, i32, i32) {
    %c0_i32 = arith.constant 0 : i32
    %c0_i32_0 = arith.constant 0 : i32
    %c0_i32_1 = arith.constant 0 : i32
    return %c0_i32, %arg0, %c0_i32_0 : i32, i32, i32
  }
  func.func @transform_3(%arg0: i32) -> (i32, i32) {
    %c0_i32 = arith.constant 0 : i32
    %c0_i32_0 = arith.constant 0 : i32
    %c0_i32_1 = arith.constant 0 : i32
    return %c0_i32, %c0_i32_0 : i32, i32
  }
  func.func @transform_4(%arg0: i32) -> (i32, i32) {
    %c0_i32 = arith.constant 0 : i32
    %c0_i32_0 = arith.constant 0 : i32
    return %c0_i32, %arg0 : i32, i32
  }
  func.func @transform_5(%arg0: i32) -> (i32, i32) {
    %c0_i32 = arith.constant 0 : i32
    %c0_i32_0 = arith.constant 0 : i32
    return %arg0, %c0_i32 : i32, i32
  }
}

</mosaic_0001>

<llo_original>
// kernel: tpu_custom_call.1
$region0: #{tpu_custom_call.1}
  #allocation0 [shape = 'u32[]', space=smem, size = 0x4, offset = 0x4, fixed_abs, tag = 'smem constant byte address 0x4 - core index']
  #allocation1 [shape = 'u32[144,128]{1,0:T(1,128)}', space=vmem, size = 0x12000, scoped, tag = 'internal scratch']
  %s0 = inlined_call_operand.vmem [shape: s32[8,8], index: 0, kind: input, shape index: {}]
  %s1 = inlined_call_operand.vmem [shape: f32[8,32], index: 1, kind: input, shape index: {}]
  %s2 = inlined_call_operand.vmem [shape: f32[2,8,32], index: 2, kind: input, shape index: {}]
  %s3 = inlined_call_operand.vmem [shape: bf16[50,32], index: 3, kind: input, shape index: {}]
  %s4 = inlined_call_operand.hbm [shape: f32[2,8], index: 4, kind: output, shape index: {0}]
  %s5 = inlined_call_operand.hbm [shape: f32[8,32], index: 5, kind: output, shape index: {1}]
  %6 = xla_tuple %s4, %s5
  %s7 = sld [smem:[#allocation0]]
  $region34: #{tpu_custom_call.1} parent=0
    _
  %s9 = ssub.s32 1, %s7
  %s10 = scalar_select 0, %s9, %s7
  $region1: #{tpu_custom_call.1} parent=0
    #allocation2 [shape = 'u8[1024]{0}', space=vmem, size = 0x400, scoped, tag = 'output window, operand 0, single buffered']
    #allocation3 [shape = 's32[1]{0}', space=sflag, size = 0x4, scoped, tag = 'scoped memory for tpu_custom_call.1']
    #allocation4 [shape = 'u8[4096]{0}', space=vmem, size = 0x1000, scoped, tag = 'output window, operand 1, single buffered']
    #allocation5 [shape = 's32[1]{0}', space=sflag, size = 0x4, scoped, tag = 'scoped memory for tpu_custom_call.1']
    %11 = vsyncpa [#allocation3], 0
    %12 = vsyncpa [#allocation5], 0
    // Predicated region
    $region2: #{tpu_custom_call.1} parent=1 // pred_check
      _
    $region3: #{tpu_custom_call.1} parent=1 // pred_check_branch
      %14 = sbr.rel (0) target = $region5
    $region4: #{tpu_custom_call.1} parent=1 // pred_region
      _
    $region5: #{tpu_custom_call.1} parent=1 // pred_fallthru
      _
    // Predicated region
    $region6: #{tpu_custom_call.1} parent=1 // pred_check
      _
    $region7: #{tpu_custom_call.1} parent=1 // pred_check_branch
      %16 = sbr.rel (0) target = $region9
    $region8: #{tpu_custom_call.1} parent=1 // pred_region
      _
    $region9: #{tpu_custom_call.1} parent=1 // pred_fallthru
      _
    // Predicated region
    $region10: #{tpu_custom_call.1} parent=1 // pred_check
      _
    $region11: #{tpu_custom_call.1} parent=1 // pred_check_branch
      %18 = sbr.rel (0) target = $region13
    $region12: #{tpu_custom_call.1} parent=1 // pred_region
      _
    $region13: #{tpu_custom_call.1} parent=1 // pred_fallthru
      _
    // Predicated region
    $region14: #{tpu_custom_call.1} parent=1 // pred_check
      _
    $region15: #{tpu_custom_call.1} parent=1 // pred_check_branch
      %20 = sbr.rel (0) target = $region17
    $region16: #{tpu_custom_call.1} parent=1 // pred_region
      _
    $region17: #{tpu_custom_call.1} parent=1 // pred_fallthru
      _
    %v22 = vld [vmem:[%s1] sm:$0xff]
    %v23 = vld [vmem:[%s2] sm:$0xff]
    %v24 = vld [vmem:[%s2 + $0x8] sm:$0xff]
    %v25 = vmul.f32 %v22, %v23
    %v26 = vmul.f32 %v22, %v24
    %vm27 = vcmask 261120
    %v28 = vsel %vm27, %v25, 0.0
    %29 = vadd.xlane.f32.xlu0 %v28
    %v30 = vpop.xlane.xlu0 %29
    %v31 = vsel %vm27, %v26, 0.0
    %32 = vadd.xlane.f32.xlu0 %v31
    %v33 = vpop.xlane.xlu0 %32
    %v36 = vlaneseq
    %v37 = vand.u32 %v36, 127
    %v38 = vlaneseq
    %v39 = vshrl.u32 %v38, 7
    %v40 = vsub.s32 %v37, %v39
    %v41 = vrot.slane %v30, %v40
    %v42 = vlaneseq
    %v43 = vshrl.u32 %v42, 7
    %v44 = vsub.s32 %v37, %v43
    %v45 = vrot.slane %v33, %v44
    %vm46 = vcmask 1041409
    %v47 = vsel %vm46, %v45, %v41
    %vm49 = vcmask 58368
    %50 = vst.msk [vmem:[#allocation2] sm:$0x3] %vm49, %v47
    %v51 = vld [vmem:[%s0] sm:$0xff]
    %vm52 = vcmp.ne.s32.totalorder %v51, 0
    %v53 = vsel %vm52, 1, 0
    %v54 = vcvt.s32.f32 %v53
    %vm55 = vcmask 64512
    %v56 = vsel %vm55, %v54, 0.0
    %57 = vadd.xlane.f32.xlu0 %v56
    %v58 = vpop.xlane.xlu0 %57
    %v59 = vmax.f32 %v58, 1.0
    %v60 = vrcp.pop %v59
    %61 = vset.pattern.permute.xlu0 0
    %62 = vperm.xlu0 %61, %v51
    %v63 = vpop.permute.xlu0 %62
    %vm64 = vcmp.eq.s32.totalorder %v63, %v37
    %v65 = vsel %vm64, 1, 0
    %v66 = vcvt.s32.f32 %v65
    %67 = vset.pattern.permute.xlu0 1
    %68 = vperm.xlu0 %67, %v51
    %v69 = vpop.permute.xlu0 %68
    %vm70 = vcmp.eq.s32.totalorder %v69, %v37
    %v71 = vsel %vm70, 1, 0
    %v72 = vcvt.s32.f32 %v71
    %v73 = vadd.f32 %v66, %v72
    %74 = vset.pattern.permute.xlu0 2
    %75 = vperm.xlu0 %74, %v51
    %v76 = vpop.permute.xlu0 %75
    %vm77 = vcmp.eq.s32.totalorder %v76, %v37
    %v78 = vsel %vm77, 1, 0
    %v79 = vcvt.s32.f32 %v78
    %v80 = vadd.f32 %v73, %v79
    %81 = vset.pattern.permute.xlu0 3
    %82 = vperm.xlu0 %81, %v51
    %v83 = vpop.permute.xlu0 %82
    %vm84 = vcmp.eq.s32.totalorder %v83, %v37
    %v85 = vsel %vm84, 1, 0
    %v86 = vcvt.s32.f32 %v85
    %v87 = vadd.f32 %v80, %v86
    %88 = vset.pattern.permute.xlu0 4
    %89 = vperm.xlu0 %88, %v51
    %v90 = vpop.permute.xlu0 %89
    %vm91 = vcmp.eq.s32.totalorder %v90, %v37
    %v92 = vsel %vm91, 1, 0
    %v93 = vcvt.s32.f32 %v92
    %v94 = vadd.f32 %v87, %v93
    %95 = vset.pattern.permute.xlu0 5
    %96 = vperm.xlu0 %95, %v51
    %v97 = vpop.permute.xlu0 %96
    %vm98 = vcmp.eq.s32.totalorder %v97, %v37
    %v99 = vsel %vm98, 1, 0
    %v100 = vcvt.s32.f32 %v99
    %v101 = vadd.f32 %v94, %v100
    %102 = vset.pattern.permute.xlu0 6
    %103 = vperm.xlu0 %102, %v51
    %v104 = vpop.permute.xlu0 %103
    %vm105 = vcmp.eq.s32.totalorder %v104, %v37
    %v106 = vsel %vm105, 1, 0
    %v107 = vcvt.s32.f32 %v106
    %v108 = vadd.f32 %v101, %v107
    %109 = vset.pattern.permute.xlu0 7
    %110 = vperm.xlu0 %109, %v51
    %v111 = vpop.permute.xlu0 %110
    %vm112 = vcmp.eq.s32.totalorder %v111, %v37
    %v113 = vsel %vm112, 1, 0
    %v114 = vcvt.s32.f32 %v113
    %v115 = vadd.f32 %v108, %v114
    %v116 = vpack.c.bf16 %v115, %v115
    %v117 = vld [vmem:[%s3] sm:$0xf]
    %v118 = vld [vmem:[%s3 + $0x4] sm:$0xf]
    %v119 = vld [vmem:[%s3 + $0x8] sm:$0xf]
    %v120 = vld [vmem:[%s3 + $0xc] sm:$0xf]
    %v121 = vld [vmem:[%s3 + $0x10] sm:$0xf]
    %v122 = vld [vmem:[%s3 + $0x14] sm:$0xf]
    %v123 = vld [vmem:[%s3 + $0x18] sm:$0x1]
    %v131 = vunpack.c.l.b16 %v117
    %v132 = vunpack.c.l.b16 %v118
    %v133 = vunpack.c.l.b16 %v119
    %v134 = vunpack.c.l.b16 %v120
    %v135 = vunpack.c.l.b16 %v121
    %v136 = vunpack.c.l.b16 %v122
    %v137 = vunpack.c.l.b16 %v123
    %v138 = vpack.c.b16 %v132, %v131
    %v139 = vpack.c.b16 %v134, %v133
    %v140 = vpack.c.b16 %v136, %v135
    %v141 = vpack.c.b16 %v137, %v137
    %vm145 = vcmask 408576
    %v147 = vsel %vm145, %v116, 0
    %vm149 = vcmask 1040384
    %v151 = vsel %vm149, %v141, 0
    %153 = vmatprep.subr.bf16.mxu0 0
    %154 = vmatpush1.bf16.msra.mxu0 %v138
    %155 = vmatprep.subr.bf16.mxu0 0
    %156 = vmatpush1.bf16.msra.mxu0 %v139
    %157 = vmatprep.subr.bf16.mxu0 0
    %158 = vmatpush1.bf16.msra.mxu0 %v140
    %159 = vmatprep.subr.bf16.mxu0 0
    %160 = vmatpush1.bf16.msra.mxu0 %v151
    %161 = vmatprep.subr.bf16.mxu0 0
    %162 = vmatpush1.bf16.msra.mxu0 0
    %163 = vmatprep.subr.bf16.mxu0 0
    %164 = vmatpush1.bf16.msra.mxu0 0
    %165 = vmatprep.subr.bf16.mxu0 0
    %166 = vmatpush1.bf16.msra.mxu0 0
    %167 = vmatprep.subr.bf16.mxu0 0
    %168 = vmatpush1.bf16.msra.mxu0 0
    %169 = vmatprep.subr.bf16.mxu0 0
    %170 = vmatpush1.bf16.msra.mxu0 0
    %171 = vmatprep.subr.bf16.mxu0 0
    %172 = vmatpush1.bf16.msra.mxu0 0
    %173 = vmatprep.subr.bf16.mxu0 0
    %174 = vmatpush1.bf16.msra.mxu0 0
    %175 = vmatprep.subr.bf16.mxu0 0
    %176 = vmatpush1.bf16.msra.mxu0 0
    %177 = vmatprep.subr.bf16.mxu0 0
    %178 = vmatpush1.bf16.msra.mxu0 0
    %179 = vmatprep.subr.bf16.mxu0 0
    %180 = vmatpush1.bf16.msra.mxu0 0
    %181 = vmatprep.subr.bf16.mxu0 0
    %182 = vmatpush1.bf16.msra.mxu0 0
    %183 = vmatprep.subr.bf16.mxu0 0
    %184 = vmatpush1.bf16.msra.mxu0 0
    %185 = vmatprep.mubr.bf16.mxu0 0
    %186 = vmatmul.mubr.bf16.gmra.mrb[0].mxu0 %v147
    %v187 = vpop.f32.mrb[0].mxu0
    %v188 = vadd.f32 0.0, %v187
    %v189 = vpop.f32.mrb[0].mxu0
    %v190 = vpop.f32.mrb[0].mxu0
    %v191 = vpop.f32.mrb[0].mxu0
    %192 = vdwg.mxu0
    %v193 = vmul.f32 %v188, %v60
    %194 = vst.msk [vmem:[#allocation4] sm:$0xff] %vm27, %v193
    // Predicated region
    $region18: #{tpu_custom_call.1} parent=1 // pred_check
      _
    $region19: #{tpu_custom_call.1} parent=1 // pred_check_branch
      %196 = sbr.rel (0) target = $region21
    $region20: #{tpu_custom_call.1} parent=1 // pred_region
      %s198 = ssub.s32 32, 32
      %199 = vsyncadd [#allocation3], %s198
      %s201 = sshll.u32 [#allocation2], 4
      %s202 = int_to_ptr.vmem [resolvable:$true] %s201
      %204 = dma.vmem_to_hbm [thread:$0]  %s202, 32, %s4, [#allocation3]
    $region21: #{tpu_custom_call.1} parent=1 // pred_fallthru
      _
    // Predicated region
    $region22: #{tpu_custom_call.1} parent=1 // pred_check
      _
    $region23: #{tpu_custom_call.1} parent=1 // pred_check_branch
      %206 = sbr.rel (0) target = $region25
    $region24: #{tpu_custom_call.1} parent=1 // pred_region
      %s208 = ssub.s32 128, 128
      %209 = vsyncadd [#allocation5], %s208
      %s211 = sshll.u32 [#allocation4], 4
      %s212 = int_to_ptr.vmem [resolvable:$true] %s211
      %214 = dma.vmem_to_hbm [thread:$0]  %s212, 128, %s5, [#allocation5]
    $region25: #{tpu_custom_call.1} parent=1 // pred_fallthru
      _
    // Predicated region
    $region26: #{tpu_custom_call.1} parent=1 // pred_check
      _
    $region27: #{tpu_custom_call.1} parent=1 // pred_check_branch
      %216 = sbr.rel (0) target = $region29
    $region28: #{tpu_custom_call.1} parent=1 // pred_region
      %217 = dma.done [#allocation3], 32
    $region29: #{tpu_custom_call.1} parent=1 // pred_fallthru
      _
    // Predicated region
    $region30: #{tpu_custom_call.1} parent=1 // pred_check
      _
    $region31: #{tpu_custom_call.1} parent=1 // pred_check_branch
      %219 = sbr.rel (0) target = $region33
    $region32: #{tpu_custom_call.1} parent=1 // pred_region
      %220 = dma.done [#allocation5], 128
    $region33: #{tpu_custom_call.1} parent=1 // pred_fallthru
      _
    %221 = vsyncpa [#allocation3], 1
    %222 = vsyncpa [#allocation5], 1

</llo_original>
